<compile_context>
chip_gen: v7x
topology: tpu7x:2x2x1
jax: 0.10.0
libtpu: 0.0.40
codegen_flags: <defaults>
</compile_context>

<pallas_src>
import jax
import jax.numpy as jnp
from jax.experimental import pallas as pl
from jax.experimental.pallas import tpu as pltpu

OUT_PAD = 128                  # lane-dense padded fc output width
NEG_INF = -1e30                # fill for padded logits (drops out of softmax)


def _round_up(x, m):
    return ((x + m - 1) // m) * m


def _vmem_budget_bytes():
    """Generation-aware scoped-VMEM budget (v5e/v6e: 128 MiB, v7x: 64 MiB)."""
    try:
        cap = pltpu.get_tpu_info().vmem_capacity_bytes
        return int(min(cap * 3 // 4, 96 * 1024 * 1024))
    except Exception:
        return 48 * 1024 * 1024   # safe on every generation


def _choose_tile(n):
    """Largest row/contraction tile (<=512) keeping >= 2 row tiles (megacore)."""
    for t in (512, 256):
        if pl.cdiv(n, t) >= 2:
            return t
    return 128


# --------------------------------------------------------------------------
# Fully fused small-graph kernel:
#   OUT = log_softmax(relu(A @ relu(A @ (X@W1) + b1) @ W2 + b2) @ Wfc + bfc)
# Everything resident in VMEM; one pallas_call, no grid.
# --------------------------------------------------------------------------
def _gcn_fused_kernel(a_ref, x_ref, w1_ref, b1_ref, w2_ref, b2_ref,
                      wfc_ref, bfc_ref, o_ref):
    a = a_ref[...]
    xw1 = jnp.dot(x_ref[...], w1_ref[...], preferred_element_type=jnp.float32)
    h1 = jnp.maximum(
        jnp.dot(a, xw1.astype(jnp.bfloat16),
                preferred_element_type=jnp.float32) + b1_ref[...], 0.0)
    xw2 = jnp.dot(h1.astype(jnp.bfloat16), w2_ref[...],
                  preferred_element_type=jnp.float32)
    h2 = jnp.maximum(
        jnp.dot(a, xw2.astype(jnp.bfloat16),
                preferred_element_type=jnp.float32) + b2_ref[...], 0.0)
    logits = jnp.dot(h2.astype(jnp.bfloat16), wfc_ref[...],
                     preferred_element_type=jnp.float32) + bfc_ref[...]
    m = jnp.max(logits, axis=1, keepdims=True)
    shifted = logits - m
    lse = jnp.log(jnp.sum(jnp.exp(shifted), axis=1, keepdims=True))
    o_ref[...] = shifted - lse


def gcn_forward_fused(a, x, w1, b1, w2, b2, wfc, bfc, *, vmem_limit):
    n_pad = a.shape[0]
    out_pad = wfc.shape[1]
    return pl.pallas_call(
        _gcn_fused_kernel,
        out_shape=jax.ShapeDtypeStruct((n_pad, out_pad), jnp.float32),
        compiler_params=pltpu.CompilerParams(vmem_limit_bytes=vmem_limit),
    )(a, x, w1, b1, w2, b2, wfc, bfc)


# --------------------------------------------------------------------------
# Tiled GCN layer:  H = relu(A_hat @ (X @ W) + b)
# grid = (row tiles, k tiles); X@W fused per k-step (no XW HBM round trip);
# f32 VMEM accumulator; bias+relu epilogue at the last k step.
# --------------------------------------------------------------------------
def _gcn_layer_kernel(a_ref, x_ref, w_ref, b_ref, o_ref, acc_ref):
    @pl.when(pl.program_id(1) == 0)
    def _():
        acc_ref[...] = jnp.zeros_like(acc_ref)

    xw = jnp.dot(x_ref[...], w_ref[...], preferred_element_type=jnp.float32)
    acc_ref[...] += jnp.dot(a_ref[...], xw.astype(jnp.bfloat16),
                            preferred_element_type=jnp.float32)

    @pl.when(pl.program_id(1) == pl.num_programs(1) - 1)
    def _():
        o_ref[...] = jnp.maximum(acc_ref[...] + b_ref[...], 0.0).astype(o_ref.dtype)


def gcn_layer_tiled(a, x, w, b, *, tm, tk, vmem_limit):
    n = a.shape[0]
    c = x.shape[1]
    h = w.shape[1]
    assert n % tm == 0 and n % tk == 0, "n_pad must be a multiple of both tiles"
    return pl.pallas_call(
        _gcn_layer_kernel,
        out_shape=jax.ShapeDtypeStruct((n, h), jnp.bfloat16),
        grid_spec=pltpu.PrefetchScalarGridSpec(
            num_scalar_prefetch=0,
            grid=(n // tm, n // tk),
            in_specs=[
                pl.BlockSpec((tm, tk), lambda i, k: (i, k)),   # A_hat (streamed)
                pl.BlockSpec((tk, c), lambda i, k: (k, 0)),    # X tile
                pl.BlockSpec((c, h), lambda i, k: (0, 0)),     # W (VMEM-resident)
                pl.BlockSpec((1, h), lambda i, k: (0, 0)),     # bias
            ],
            out_specs=pl.BlockSpec((tm, h), lambda i, k: (i, 0)),
            scratch_shapes=[pltpu.VMEM((tm, h), jnp.float32)],
        ),
        compiler_params=pltpu.CompilerParams(
            dimension_semantics=("parallel", "arbitrary"),
            vmem_limit_bytes=vmem_limit,
        ),
    )(a, x, w, b)


# --------------------------------------------------------------------------
# Tiled last layer + fc + log_softmax (fused epilogue at last k):
#   OUT = log_softmax(relu(A_hat @ (X @ W) + b) @ Wfc_pad + bfc_pad)
# Output is lane-dense [N, OUT_PAD] f32; padded logits are -1e30 so exp -> 0.
# --------------------------------------------------------------------------
def _gcn_layer_fc_lsm_kernel(a_ref, x_ref, w_ref, b_ref, wfc_ref, bfc_ref,
                             o_ref, acc_ref):
    @pl.when(pl.program_id(1) == 0)
    def _():
        acc_ref[...] = jnp.zeros_like(acc_ref)

    xw = jnp.dot(x_ref[...], w_ref[...], preferred_element_type=jnp.float32)
    acc_ref[...] += jnp.dot(a_ref[...], xw.astype(jnp.bfloat16),
                            preferred_element_type=jnp.float32)

    @pl.when(pl.program_id(1) == pl.num_programs(1) - 1)
    def _():
        hfeat = jnp.maximum(acc_ref[...] + b_ref[...], 0.0)
        logits = jnp.dot(hfeat.astype(jnp.bfloat16), wfc_ref[...],
                         preferred_element_type=jnp.float32) + bfc_ref[...]
        m = jnp.max(logits, axis=1, keepdims=True)
        shifted = logits - m
        lse = jnp.log(jnp.sum(jnp.exp(shifted), axis=1, keepdims=True))
        o_ref[...] = shifted - lse


def gcn_layer_fc_lsm_tiled(a, x, w, b, wfc, bfc, *, tm, tk, vmem_limit):
    n = a.shape[0]
    c = x.shape[1]
    h = w.shape[1]
    out_pad = wfc.shape[1]
    assert n % tm == 0 and n % tk == 0, "n_pad must be a multiple of both tiles"
    return pl.pallas_call(
        _gcn_layer_fc_lsm_kernel,
        out_shape=jax.ShapeDtypeStruct((n, out_pad), jnp.float32),
        grid_spec=pltpu.PrefetchScalarGridSpec(
            num_scalar_prefetch=0,
            grid=(n // tm, n // tk),
            in_specs=[
                pl.BlockSpec((tm, tk), lambda i, k: (i, k)),       # A_hat
                pl.BlockSpec((tk, c), lambda i, k: (k, 0)),        # X tile
                pl.BlockSpec((c, h), lambda i, k: (0, 0)),         # W
                pl.BlockSpec((1, h), lambda i, k: (0, 0)),         # bias
                pl.BlockSpec((h, out_pad), lambda i, k: (0, 0)),   # Wfc
                pl.BlockSpec((1, out_pad), lambda i, k: (0, 0)),   # bfc
            ],
            out_specs=pl.BlockSpec((tm, out_pad), lambda i, k: (i, 0)),
            scratch_shapes=[pltpu.VMEM((tm, h), jnp.float32)],
        ),
        compiler_params=pltpu.CompilerParams(
            dimension_semantics=("parallel", "arbitrary"),
            vmem_limit_bytes=vmem_limit,
        ),
    )(a, x, w, b, wfc, bfc)


# --------------------------------------------------------------------------
# Glue: dense normalized adjacency from edge_index (matches PyG GCNConv norm)
# --------------------------------------------------------------------------
def build_normalized_adjacency(edge_index, num_nodes):
    row, col = edge_index[0], edge_index[1]          # row = src, col = dst
    loop = jnp.arange(num_nodes, dtype=edge_index.dtype)
    row = jnp.concatenate([row, loop])
    col = jnp.concatenate([col, loop])
    deg = jnp.zeros((num_nodes,), dtype=jnp.float32).at[col].add(1.0)
    deg_inv_sqrt = jnp.where(deg > 0, deg ** -0.5, 0.0)
    norm = deg_inv_sqrt[row] * deg_inv_sqrt[col]
    # out[dst] += norm * x[src]  ==>  A_hat[col, row] += norm
    a_hat = jnp.zeros((num_nodes, num_nodes), dtype=jnp.float32)
    a_hat = a_hat.at[col, row].add(norm)
    return a_hat


def gcn_model_forward(x, edge_index, w1, b1, w2, b2, wfc, bfc, *,
                      force_tiled=False):
    n, in_c = x.shape
    h1_dim = w1.shape[1]
    h2_dim = w2.shape[1]
    out_c = wfc.shape[1]

    in_c_pad = _round_up(in_c, 128)     # lane-dense layer-1 features
    h1_pad = _round_up(h1_dim, 128)
    h2_pad = _round_up(h2_dim, 128)     # lane-dense layer-2 features (64 -> 128)

    vmem_limit = _vmem_budget_bytes()

    # Fused single-kernel path if A_hat + temporaries comfortably fit VMEM.
    n_pad_fused = _round_up(n, 128)
    fused_bytes = (2 * n_pad_fused * n_pad_fused                       # A bf16
                   + 2 * n_pad_fused * in_c_pad                        # X bf16
                   + 6 * 4 * n_pad_fused * max(h1_pad, h2_pad, OUT_PAD))
    use_fused = (not force_tiled) and fused_bytes <= vmem_limit // 2

    if use_fused:
        n_pad = n_pad_fused
        tile = None
    else:
        tile = _choose_tile(n)
        n_pad = _round_up(n, tile)
        assert n_pad % tile == 0

    a_hat = build_normalized_adjacency(edge_index, n)
    a_pad = jnp.zeros((n_pad, n_pad), jnp.bfloat16)
    a_pad = a_pad.at[:n, :n].set(a_hat.astype(jnp.bfloat16))

    x_pad = jnp.zeros((n_pad, in_c_pad), jnp.bfloat16)
    x_pad = x_pad.at[:n, :in_c].set(x.astype(jnp.bfloat16))

    # Zero-padded parameters (zero columns/rows contribute exactly 0).
    w1_pad = jnp.zeros((in_c_pad, h1_pad), jnp.bfloat16)
    w1_pad = w1_pad.at[:in_c, :h1_dim].set(w1.astype(jnp.bfloat16))
    b1_pad = jnp.zeros((1, h1_pad), jnp.float32)
    b1_pad = b1_pad.at[:, :h1_dim].set(b1.reshape(1, -1).astype(jnp.float32))

    w2_pad = jnp.zeros((h1_pad, h2_pad), jnp.bfloat16)
    w2_pad = w2_pad.at[:h1_dim, :h2_dim].set(w2.astype(jnp.bfloat16))
    b2_pad = jnp.zeros((1, h2_pad), jnp.float32)
    b2_pad = b2_pad.at[:, :h2_dim].set(b2.reshape(1, -1).astype(jnp.float32))

    # fc params: lane-dense output; padded output lanes get bias -1e30 so they
    # vanish in the softmax, padded input rows are zero.
    wfc_pad = jnp.zeros((h2_pad, OUT_PAD), jnp.bfloat16)
    wfc_pad = wfc_pad.at[:h2_dim, :out_c].set(wfc.astype(jnp.bfloat16))
    bfc_pad = jnp.full((1, OUT_PAD), NEG_INF, jnp.float32)
    bfc_pad = bfc_pad.at[:, :out_c].set(bfc.reshape(1, -1).astype(jnp.float32))

    if use_fused:
        out_full = gcn_forward_fused(a_pad, x_pad, w1_pad, b1_pad, w2_pad,
                                     b2_pad, wfc_pad, bfc_pad,
                                     vmem_limit=vmem_limit)
    else:
        h1 = gcn_layer_tiled(a_pad, x_pad, w1_pad, b1_pad,
                             tm=tile, tk=tile, vmem_limit=vmem_limit)
        out_full = gcn_layer_fc_lsm_tiled(a_pad, h1, w2_pad, b2_pad,
                                          wfc_pad, bfc_pad,
                                          tm=tile, tk=tile,
                                          vmem_limit=vmem_limit)
    return out_full[:n, :out_c]


# --------------------------------------------------------------------------
# References
# --------------------------------------------------------------------------
def reference_forward(a_hat, x, w1, b1, w2, b2, wfc, bfc, *, use_bf16):
    if use_bf16:
        def mm(p, q):
            return jnp.dot(p.astype(jnp.bfloat16), q.astype(jnp.bfloat16),
                           preferred_element_type=jnp.float32)
    else:
        def mm(p, q):
            return jnp.dot(p, q, preferred_element_type=jnp.float32)
    h = jnp.maximum(mm(a_hat, mm(x, w1)) + b1.reshape(1, -1), 0.0)
    h = jnp.maximum(mm(a_hat, mm(h, w2)) + b2.reshape(1, -1), 0.0)
    logits = mm(h, wfc) + bfc.reshape(1, -1)
    return jax.nn.log_softmax(logits, axis=1)


if __name__ == "__main__":
    IN_C, OUT_C = 16, 8
    H1, H2 = 128, 64            # GCNConv hidden sizes from the module

    key = jax.random.PRNGKey(0)
    (kx, ke1, ke2, kw1, kw2, kwfc, kbfc, kx2, ke3, ke4) = jax.random.split(key, 10)

    # deterministic parameter init (GCNConv bias is zeroed in reset_parameters)
    w1 = jax.random.normal(kw1, (IN_C, H1), dtype=jnp.float32) * 0.1
    b1 = jnp.zeros((H1,), dtype=jnp.float32)
    w2 = jax.random.normal(kw2, (H1, H2), dtype=jnp.float32) * 0.1
    b2 = jnp.zeros((H2,), dtype=jnp.float32)
    wfc = jax.random.normal(kwfc, (H2, OUT_C), dtype=jnp.float32) * 0.1
    bfc = jax.random.normal(kbfc, (OUT_C,), dtype=jnp.float32) * 0.1

    fwd = jax.jit(gcn_model_forward, static_argnames=("force_tiled",))

    def run_and_check(n, e, kxx, ks, kd, *, force_tiled, atol_bf16):
        x = jax.random.normal(kxx, (n, IN_C), dtype=jnp.float32)
        src = jax.random.randint(ks, (e,), 0, n, dtype=jnp.int32)
        dst = jax.random.randint(kd, (e,), 0, n, dtype=jnp.int32)
        edge_index = jnp.stack([src, dst], axis=0)

        out = jax.block_until_ready(
            fwd(x, edge_index, w1, b1, w2, b2, wfc, bfc, force_tiled=force_tiled))

        a_hat = build_normalized_adjacency(edge_index, n)
        ref16 = reference_forward(a_hat, x, w1, b1, w2, b2, wfc, bfc, use_bf16=True)
        ref32 = reference_forward(a_hat, x, w1, b1, w2, b2, wfc, bfc, use_bf16=False)

        assert out.shape == (n, OUT_C)
        # tight check vs a reference mimicking the kernel's bf16/f32-acc path
        assert jnp.allclose(out, ref16, atol=atol_bf16, rtol=atol_bf16), \
            float(jnp.max(jnp.abs(out - ref16)))
        # loose semantic check vs the pure-f32 PyTorch-equivalent reference
        assert jnp.allclose(out, ref32, atol=1e-1, rtol=1e-1), \
            float(jnp.max(jnp.abs(out - ref32)))
        return out

    # Test 1: demo-sized graph -> fully fused single-kernel path (N_pad = 128).
    run_and_check(16, 40, kx, ke1, ke2, force_tiled=False, atol_bf16=1e-2)
    # Test 2: larger graph -> tiled two-kernel path (TM = TK = 512, grid (2, 2)).
    run_and_check(600, 2400, kx2, ke3, ke4, force_tiled=True, atol_bf16=2e-2)

    print("KERNEL_OK")
</pallas_src>

<mosaic_0001>
module attributes {stable_mosaic.version = 11 : i64} {
  func.func @_gcn_fused_kernel(%arg0: memref<128x128xbf16, #tpu.memory_space<vmem>>, %arg1: memref<128x128xbf16, #tpu.memory_space<vmem>>, %arg2: memref<128x128xbf16, #tpu.memory_space<vmem>>, %arg3: memref<1x128xf32, #tpu.memory_space<vmem>>, %arg4: memref<128x128xbf16, #tpu.memory_space<vmem>>, %arg5: memref<1x128xf32, #tpu.memory_space<vmem>>, %arg6: memref<128x128xbf16, #tpu.memory_space<vmem>>, %arg7: memref<1x128xf32, #tpu.memory_space<vmem>>, %arg8: memref<128x128xf32, #tpu.memory_space<vmem>>) attributes {dimension_semantics = [], scalar_prefetch = 0 : i64, scratch_operands = 0 : i64, tpu.core_type = #tpu.core_type<tc>} {
    %c0 = arith.constant 0 : index
    %c0_0 = arith.constant 0 : index
    %0 = vector.load %arg0[%c0, %c0_0] : memref<128x128xbf16, #tpu.memory_space<vmem>>, vector<128x128xbf16>
    %c0_1 = arith.constant 0 : index
    %c0_2 = arith.constant 0 : index
    %1 = vector.load %arg1[%c0_1, %c0_2] : memref<128x128xbf16, #tpu.memory_space<vmem>>, vector<128x128xbf16>
    %c0_3 = arith.constant 0 : index
    %c0_4 = arith.constant 0 : index
    %2 = vector.load %arg2[%c0_3, %c0_4] : memref<128x128xbf16, #tpu.memory_space<vmem>>, vector<128x128xbf16>
    %cst = arith.constant dense<0.000000e+00> : vector<128x128xf32>
    %3 = tpu.matmul %1, %2, %cst {dimension_numbers = #tpu.dot_dimension_numbers<[1], [0], [0], [1], [0, 0, 1, 1], [], []>} : vector<128x128xbf16>, vector<128x128xbf16>, vector<128x128xf32> -> vector<128x128xf32>
    %4 = arith.truncf %3 : vector<128x128xf32> to vector<128x128xbf16>
    %cst_5 = arith.constant dense<0.000000e+00> : vector<128x128xf32>
    %5 = tpu.matmul %0, %4, %cst_5 {dimension_numbers = #tpu.dot_dimension_numbers<[1], [0], [0], [1], [0, 0, 1, 1], [], []>} : vector<128x128xbf16>, vector<128x128xbf16>, vector<128x128xf32> -> vector<128x128xf32>
    %c0_6 = arith.constant 0 : index
    %c0_7 = arith.constant 0 : index
    %6 = vector.load %arg3[%c0_6, %c0_7] : memref<1x128xf32, #tpu.memory_space<vmem>>, vector<1x128xf32>
    %7 = vector.broadcast %6 : vector<1x128xf32> to vector<128x128xf32>
    %8 = arith.addf %5, %7 : vector<128x128xf32>
    %cst_8 = arith.constant 0.000000e+00 : f32
    %9 = vector.broadcast %cst_8 : f32 to vector<128x128xf32>
    %10 = arith.maximumf %8, %9 : vector<128x128xf32>
    %11 = arith.truncf %10 : vector<128x128xf32> to vector<128x128xbf16>
    %c0_9 = arith.constant 0 : index
    %c0_10 = arith.constant 0 : index
    %12 = vector.load %arg4[%c0_9, %c0_10] : memref<128x128xbf16, #tpu.memory_space<vmem>>, vector<128x128xbf16>
    %cst_11 = arith.constant dense<0.000000e+00> : vector<128x128xf32>
    %13 = tpu.matmul %11, %12, %cst_11 {dimension_numbers = #tpu.dot_dimension_numbers<[1], [0], [0], [1], [0, 0, 1, 1], [], []>} : vector<128x128xbf16>, vector<128x128xbf16>, vector<128x128xf32> -> vector<128x128xf32>
    %14 = arith.truncf %13 : vector<128x128xf32> to vector<128x128xbf16>
    %cst_12 = arith.constant dense<0.000000e+00> : vector<128x128xf32>
    %15 = tpu.matmul %0, %14, %cst_12 {dimension_numbers = #tpu.dot_dimension_numbers<[1], [0], [0], [1], [0, 0, 1, 1], [], []>} : vector<128x128xbf16>, vector<128x128xbf16>, vector<128x128xf32> -> vector<128x128xf32>
    %c0_13 = arith.constant 0 : index
    %c0_14 = arith.constant 0 : index
    %16 = vector.load %arg5[%c0_13, %c0_14] : memref<1x128xf32, #tpu.memory_space<vmem>>, vector<1x128xf32>
    %17 = vector.broadcast %16 : vector<1x128xf32> to vector<128x128xf32>
    %18 = arith.addf %15, %17 : vector<128x128xf32>
    %cst_15 = arith.constant 0.000000e+00 : f32
    %19 = vector.broadcast %cst_15 : f32 to vector<128x128xf32>
    %20 = arith.maximumf %18, %19 : vector<128x128xf32>
    %21 = arith.truncf %20 : vector<128x128xf32> to vector<128x128xbf16>
    %c0_16 = arith.constant 0 : index
    %c0_17 = arith.constant 0 : index
    %22 = vector.load %arg6[%c0_16, %c0_17] : memref<128x128xbf16, #tpu.memory_space<vmem>>, vector<128x128xbf16>
    %cst_18 = arith.constant dense<0.000000e+00> : vector<128x128xf32>
    %23 = tpu.matmul %21, %22, %cst_18 {dimension_numbers = #tpu.dot_dimension_numbers<[1], [0], [0], [1], [0, 0, 1, 1], [], []>} : vector<128x128xbf16>, vector<128x128xbf16>, vector<128x128xf32> -> vector<128x128xf32>
    %c0_19 = arith.constant 0 : index
    %c0_20 = arith.constant 0 : index
    %24 = vector.load %arg7[%c0_19, %c0_20] : memref<1x128xf32, #tpu.memory_space<vmem>>, vector<1x128xf32>
    %25 = vector.broadcast %24 : vector<1x128xf32> to vector<128x128xf32>
    %26 = arith.addf %23, %25 : vector<128x128xf32>
    %cst_21 = arith.constant dense<0xFF800000> : vector<128xf32>
    %27 = vector.multi_reduction <maximumf>, %26, %cst_21 [1] : vector<128x128xf32> to vector<128xf32>
    %28 = vector.shape_cast %27 : vector<128xf32> to vector<128x1xf32>
    %29 = vector.broadcast %28 : vector<128x1xf32> to vector<128x128xf32>
    %30 = arith.subf %26, %29 : vector<128x128xf32>
    %31 = math.exp %30 : vector<128x128xf32>
    %cst_22 = arith.constant dense<0.000000e+00> : vector<128xf32>
    %32 = vector.multi_reduction <add>, %31, %cst_22 [1] : vector<128x128xf32> to vector<128xf32>
    %33 = vector.shape_cast %32 : vector<128xf32> to vector<128x1xf32>
    %34 = math.log %33 : vector<128x1xf32>
    %35 = vector.broadcast %34 : vector<128x1xf32> to vector<128x128xf32>
    %36 = arith.subf %30, %35 : vector<128x128xf32>
    %c0_23 = arith.constant 0 : index
    %c0_24 = arith.constant 0 : index
    %37 = vector.load %arg8[%c0_23, %c0_24] : memref<128x128xf32, #tpu.memory_space<vmem>>, vector<128x128xf32>
    tpu.vector_store %arg8[%c0_23, %c0_24], %36 {strides = array<i32>} : memref<128x128xf32, #tpu.memory_space<vmem>>, vector<128x128xf32>,
    return
  }
}

</mosaic_0001>

<llo_original>
// kernel: mul.1
$region0: #{mul.1}
  #allocation0 [shape = 's32[1]{0}', space=sflag, size = 0x4, scoped, tag = 'scoped memory for mul.1']
  %s0 = inlined_call_operand.vmem [shape: f32[56], index: 0, kind: input, shape index: {}]
  %s1 = inlined_call_operand.vmem [shape: f32[56], index: 1, kind: input, shape index: {}]
  %s2 = inlined_call_operand.vmem [shape: f32[56], index: 2, kind: output, shape index: {}]
  %v3 = vld [vmem:[%s0] sm:$0x1]
  %v4 = vld [vmem:[%s1] sm:$0x1]
  %5 = xla_tuple %v3, %v4
  %6 = xla_tuple %5
  %v7 = vmul.f32 %v3, %v4
  %8 = xla_tuple %v7
  %9 = vst [vmem:[%s2] sm:$0x1] %v7

// kernel: gcn_model_forward.1
$region0: #{gcn_model_forward.1}
  #allocation0 [shape = 'u32[]', space=smem, size = 0x4, offset = 0x4, fixed_abs, tag = 'smem constant byte address 0x4 - core index']
  #allocation1 [shape = 'u32[144,128]{1,0:T(1,128)}', space=vmem, size = 0x12000, scoped, tag = 'internal scratch']
  %s0 = inlined_call_operand.vmem [shape: bf16[128,128], index: 0, kind: input, shape index: {}]
  %s1 = inlined_call_operand.vmem [shape: bf16[128,128], index: 1, kind: input, shape index: {}]
  %s2 = inlined_call_operand.vmem [shape: bf16[128,128], index: 2, kind: input, shape index: {}]
  %s3 = inlined_call_operand.vmem [shape: f32[1,128], index: 3, kind: input, shape index: {}]
  %s4 = inlined_call_operand.vmem [shape: bf16[128,128], index: 4, kind: input, shape index: {}]
  %s5 = inlined_call_operand.vmem [shape: f32[1,128], index: 5, kind: input, shape index: {}]
  %s6 = inlined_call_operand.vmem [shape: bf16[128,128], index: 6, kind: input, shape index: {}]
  %s7 = inlined_call_operand.vmem [shape: f32[1,128], index: 7, kind: input, shape index: {}]
  %s8 = inlined_call_operand.vmem [shape: f32[128,128], index: 8, kind: output, shape index: {}]
  %s9 = sld [smem:[#allocation0]]
  $region42: #{gcn_model_forward.1} parent=0
    _
  %s11 = ssub.s32 1, %s9
  %s12 = scalar_select 0, %s11, %s9
  // Predicated region
  $region2: #{gcn_model_forward.1} parent=0 // pred_check
    _
  $region3: #{gcn_model_forward.1} parent=0 // pred_check_branch
    %14 = sbr.rel (0) target = $region5
  $region4: #{gcn_model_forward.1} parent=0 // pred_region
    _
  $region5: #{gcn_model_forward.1} parent=0 // pred_fallthru
    _
  // Predicated region
  $region6: #{gcn_model_forward.1} parent=0 // pred_check
    _
  $region7: #{gcn_model_forward.1} parent=0 // pred_check_branch
    %16 = sbr.rel (0) target = $region9
  $region8: #{gcn_model_forward.1} parent=0 // pred_region
    _
  $region9: #{gcn_model_forward.1} parent=0 // pred_fallthru
    _
  // Predicated region
  $region10: #{gcn_model_forward.1} parent=0 // pred_check
    _
  $region11: #{gcn_model_forward.1} parent=0 // pred_check_branch
    %18 = sbr.rel (0) target = $region13
  $region12: #{gcn_model_forward.1} parent=0 // pred_region
    _
  $region13: #{gcn_model_forward.1} parent=0 // pred_fallthru
    _
  // Predicated region
  $region14: #{gcn_model_forward.1} parent=0 // pred_check
    _
  $region15: #{gcn_model_forward.1} parent=0 // pred_check_branch
    %20 = sbr.rel (0) target = $region17
  $region16: #{gcn_model_forward.1} parent=0 // pred_region
    _
  $region17: #{gcn_model_forward.1} parent=0 // pred_fallthru
    _
  // Predicated region
  $region18: #{gcn_model_forward.1} parent=0 // pred_check
    _
  $region19: #{gcn_model_forward.1} parent=0 // pred_check_branch
    %22 = sbr.rel (0) target = $region21
  $region20: #{gcn_model_forward.1} parent=0 // pred_region
    _
  $region21: #{gcn_model_forward.1} parent=0 // pred_fallthru
    _
  // Predicated region
  $region22: #{gcn_model_forward.1} parent=0 // pred_check
    _
  $region23: #{gcn_model_forward.1} parent=0 // pred_check_branch
    %24 = sbr.rel (0) target = $region25
  $region24: #{gcn_model_forward.1} parent=0 // pred_region
    _
  $region25: #{gcn_model_forward.1} parent=0 // pred_fallthru
    _
  // Predicated region
  $region26: #{gcn_model_forward.1} parent=0 // pred_check
    _
  $region27: #{gcn_model_forward.1} parent=0 // pred_check_branch
    %26 = sbr.rel (0) target = $region29
  $region28: #{gcn_model_forward.1} parent=0 // pred_region
    _
  $region29: #{gcn_model_forward.1} parent=0 // pred_fallthru
    _
  // Predicated region
  $region30: #{gcn_model_forward.1} parent=0 // pred_check
    _
  $region31: #{gcn_model_forward.1} parent=0 // pred_check_branch
    %28 = sbr.rel (0) target = $region33
  $region32: #{gcn_model_forward.1} parent=0 // pred_region
    _
  $region33: #{gcn_model_forward.1} parent=0 // pred_fallthru
    _
  %v30 = vld [vmem:[%s0] sm:$0xf]
  %v31 = vld [vmem:[%s0 + $0x4] sm:$0xf]
  %v32 = vld [vmem:[%s0 + $0x8] sm:$0xf]
  %v33 = vld [vmem:[%s0 + $0xc] sm:$0xf]
  %v34 = vld [vmem:[%s0 + $0x10] sm:$0xf]
  %v35 = vld [vmem:[%s0 + $0x14] sm:$0xf]
  %v36 = vld [vmem:[%s0 + $0x18] sm:$0xf]
  %v37 = vld [vmem:[%s0 + $0x1c] sm:$0xf]
  %v38 = vld [vmem:[%s0 + $0x20] sm:$0xf]
  %v39 = vld [vmem:[%s0 + $0x24] sm:$0xf]
  %v40 = vld [vmem:[%s0 + $0x28] sm:$0xf]
  %v41 = vld [vmem:[%s0 + $0x2c] sm:$0xf]
  %v42 = vld [vmem:[%s0 + $0x30] sm:$0xf]
  %v43 = vld [vmem:[%s0 + $0x34] sm:$0xf]
  %v44 = vld [vmem:[%s0 + $0x38] sm:$0xf]
  %v45 = vld [vmem:[%s0 + $0x3c] sm:$0xf]
  %v46 = vld [vmem:[%s1] sm:$0xf]
  %v47 = vld [vmem:[%s1 + $0x4] sm:$0xf]
  %v48 = vld [vmem:[%s1 + $0x8] sm:$0xf]
  %v49 = vld [vmem:[%s1 + $0xc] sm:$0xf]
  %v50 = vld [vmem:[%s1 + $0x10] sm:$0xf]
  %v51 = vld [vmem:[%s1 + $0x14] sm:$0xf]
  %v52 = vld [vmem:[%s1 + $0x18] sm:$0xf]
  %v53 = vld [vmem:[%s1 + $0x1c] sm:$0xf]
  %v54 = vld [vmem:[%s1 + $0x20] sm:$0xf]
  %v55 = vld [vmem:[%s1 + $0x24] sm:$0xf]
  %v56 = vld [vmem:[%s1 + $0x28] sm:$0xf]
  %v57 = vld [vmem:[%s1 + $0x2c] sm:$0xf]
  %v58 = vld [vmem:[%s1 + $0x30] sm:$0xf]
  %v59 = vld [vmem:[%s1 + $0x34] sm:$0xf]
  %v60 = vld [vmem:[%s1 + $0x38] sm:$0xf]
  %v61 = vld [vmem:[%s1 + $0x3c] sm:$0xf]
  %v62 = vld [vmem:[%s2] sm:$0xf]
  %v63 = vld [vmem:[%s2 + $0x4] sm:$0xf]
  %v64 = vld [vmem:[%s2 + $0x8] sm:$0xf]
  %v65 = vld [vmem:[%s2 + $0xc] sm:$0xf]
  %v66 = vld [vmem:[%s2 + $0x10] sm:$0xf]
  %v67 = vld [vmem:[%s2 + $0x14] sm:$0xf]
  %v68 = vld [vmem:[%s2 + $0x18] sm:$0xf]
  %v69 = vld [vmem:[%s2 + $0x1c] sm:$0xf]
  %v70 = vld [vmem:[%s2 + $0x20] sm:$0xf]
  %v71 = vld [vmem:[%s2 + $0x24] sm:$0xf]
  %v72 = vld [vmem:[%s2 + $0x28] sm:$0xf]
  %v73 = vld [vmem:[%s2 + $0x2c] sm:$0xf]
  %v74 = vld [vmem:[%s2 + $0x30] sm:$0xf]
  %v75 = vld [vmem:[%s2 + $0x34] sm:$0xf]
  %v76 = vld [vmem:[%s2 + $0x38] sm:$0xf]
  %v77 = vld [vmem:[%s2 + $0x3c] sm:$0xf]
  %v94 = vunpack.c.l.b16 %v46
  %v95 = vunpack.c.l.b16 %v47
  %v96 = vunpack.c.l.b16 %v48
  %v97 = vunpack.c.l.b16 %v49
  %v98 = vunpack.c.l.b16 %v50
  %v99 = vunpack.c.l.b16 %v51
  %v100 = vunpack.c.l.b16 %v52
  %v101 = vunpack.c.l.b16 %v53
  %v102 = vunpack.c.l.b16 %v54
  %v103 = vunpack.c.l.b16 %v55
  %v104 = vunpack.c.l.b16 %v56
  %v105 = vunpack.c.l.b16 %v57
  %v106 = vunpack.c.l.b16 %v58
  %v107 = vunpack.c.l.b16 %v59
  %v108 = vunpack.c.l.b16 %v60
  %v109 = vunpack.c.l.b16 %v61
  %v110 = vpack.c.b16 %v95, %v94
  %v111 = vpack.c.b16 %v97, %v96
  %v112 = vpack.c.b16 %v99, %v98
  %v113 = vpack.c.b16 %v101, %v100
  %v114 = vpack.c.b16 %v103, %v102
  %v115 = vpack.c.b16 %v105, %v104
  %v116 = vpack.c.b16 %v107, %v106
  %v117 = vpack.c.b16 %v109, %v108
  %v142 = vunpack.c.l.b16 %v62
  %v143 = vunpack.c.l.b16 %v63
  %v144 = vunpack.c.l.b16 %v64
  %v145 = vunpack.c.l.b16 %v65
  %v146 = vunpack.c.l.b16 %v66
  %v147 = vunpack.c.l.b16 %v67
  %v148 = vunpack.c.l.b16 %v68
  %v149 = vunpack.c.l.b16 %v69
  %v150 = vunpack.c.l.b16 %v70
  %v151 = vunpack.c.l.b16 %v71
  %v152 = vunpack.c.l.b16 %v72
  %v153 = vunpack.c.l.b16 %v73
  %v154 = vunpack.c.l.b16 %v74
  %v155 = vunpack.c.l.b16 %v75
  %v156 = vunpack.c.l.b16 %v76
  %v157 = vunpack.c.l.b16 %v77
  %v158 = vpack.c.b16 %v143, %v142
  %v159 = vpack.c.b16 %v145, %v144
  %v160 = vpack.c.b16 %v147, %v146
  %v161 = vpack.c.b16 %v149, %v148
  %v162 = vpack.c.b16 %v151, %v150
  %v163 = vpack.c.b16 %v153, %v152
  %v164 = vpack.c.b16 %v155, %v154
  %v165 = vpack.c.b16 %v157, %v156
  %174 = vmatprep.subr.bf16.mxu0 0
  %175 = vmatpush1.bf16.msra.mxu0 %v158
  %176 = vmatprep.subr.bf16.mxu0 0
  %177 = vmatpush1.bf16.msra.mxu0 %v159
  %178 = vmatprep.subr.bf16.mxu0 0
  %179 = vmatpush1.bf16.msra.mxu0 %v160
  %180 = vmatprep.subr.bf16.mxu0 0
  %181 = vmatpush1.bf16.msra.mxu0 %v161
  %182 = vmatprep.subr.bf16.mxu0 0
  %183 = vmatpush1.bf16.msra.mxu0 %v162
  %184 = vmatprep.subr.bf16.mxu0 0
  %185 = vmatpush1.bf16.msra.mxu0 %v163
  %186 = vmatprep.subr.bf16.mxu0 0
  %187 = vmatpush1.bf16.msra.mxu0 %v164
  %188 = vmatprep.subr.bf16.mxu0 0
  %189 = vmatpush1.bf16.msra.mxu0 %v165
  %190 = vmatprep.subr.bf16.mxu0 0
  %191 = vmatpush1.bf16.msra.mxu0 0
  %192 = vmatprep.subr.bf16.mxu0 0
  %193 = vmatpush1.bf16.msra.mxu0 0
  %194 = vmatprep.subr.bf16.mxu0 0
  %195 = vmatpush1.bf16.msra.mxu0 0
  %196 = vmatprep.subr.bf16.mxu0 0
  %197 = vmatpush1.bf16.msra.mxu0 0
  %198 = vmatprep.subr.bf16.mxu0 0
  %199 = vmatpush1.bf16.msra.mxu0 0
  %200 = vmatprep.subr.bf16.mxu0 0
  %201 = vmatpush1.bf16.msra.mxu0 0
  %202 = vmatprep.subr.bf16.mxu0 0
  %203 = vmatpush1.bf16.msra.mxu0 0
  %204 = vmatprep.subr.bf16.mxu0 0
  %205 = vmatpush1.bf16.msra.mxu0 0
  %206 = vmatprep.mubr.bf16.mxu0 0
  %207 = vmatmul.mubr.bf16.gmra.mrb[0].mxu0 %v110
  %v208 = vpop.f32.mrb[0].mxu0
  %v209 = vadd.f32 0.0, %v208
  %v210 = vpop.f32.mrb[0].mxu0
  %v211 = vpop.f32.mrb[0].mxu0
  %v212 = vadd.f32 0.0, %v211
  %v213 = vpop.f32.mrb[0].mxu0
  %214 = vmatprep.mubr.bf16.mxu0 0
  %215 = vmatmul.mubr.bf16.gmra.mrb[0].mxu0 %v111
  %v216 = vpop.f32.mrb[0].mxu0
  %v217 = vadd.f32 0.0, %v216
  %v218 = vpop.f32.mrb[0].mxu0
  %v219 = vpop.f32.mrb[0].mxu0
  %v220 = vadd.f32 0.0, %v219
  %v221 = vpop.f32.mrb[0].mxu0
  %222 = vmatprep.mubr.bf16.mxu0 0
  %223 = vmatmul.mubr.bf16.gmra.mrb[0].mxu0 %v112
  %v224 = vpop.f32.mrb[0].mxu0
  %v225 = vadd.f32 0.0, %v224
  %v226 = vpop.f32.mrb[0].mxu0
  %v227 = vpop.f32.mrb[0].mxu0
  %v228 = vadd.f32 0.0, %v227
  %v229 = vpop.f32.mrb[0].mxu0
  %230 = vmatprep.mubr.bf16.mxu0 0
  %231 = vmatmul.mubr.bf16.gmra.mrb[0].mxu0 %v113
  %v232 = vpop.f32.mrb[0].mxu0
  %v233 = vadd.f32 0.0, %v232
  %v234 = vpop.f32.mrb[0].mxu0
  %v235 = vpop.f32.mrb[0].mxu0
  %v236 = vadd.f32 0.0, %v235
  %v237 = vpop.f32.mrb[0].mxu0
  %238 = vmatprep.mubr.bf16.mxu0 0
  %239 = vmatmul.mubr.bf16.gmra.mrb[0].mxu0 %v114
  %v240 = vpop.f32.mrb[0].mxu0
  %v241 = vadd.f32 0.0, %v240
  %v242 = vpop.f32.mrb[0].mxu0
  %v243 = vpop.f32.mrb[0].mxu0
  %v244 = vadd.f32 0.0, %v243
  %v245 = vpop.f32.mrb[0].mxu0
  %246 = vmatprep.mubr.bf16.mxu0 0
  %247 = vmatmul.mubr.bf16.gmra.mrb[0].mxu0 %v115
  %v248 = vpop.f32.mrb[0].mxu0
  %v249 = vadd.f32 0.0, %v248
  %v250 = vpop.f32.mrb[0].mxu0
  %v251 = vpop.f32.mrb[0].mxu0
  %v252 = vadd.f32 0.0, %v251
  %v253 = vpop.f32.mrb[0].mxu0
  %254 = vmatprep.mubr.bf16.mxu0 0
  %255 = vmatmul.mubr.bf16.gmra.mrb[0].mxu0 %v116
  %v256 = vpop.f32.mrb[0].mxu0
  %v257 = vadd.f32 0.0, %v256
  %v258 = vpop.f32.mrb[0].mxu0
  %v259 = vpop.f32.mrb[0].mxu0
  %v260 = vadd.f32 0.0, %v259
  %v261 = vpop.f32.mrb[0].mxu0
  %262 = vmatprep.mubr.bf16.mxu0 0
  %263 = vmatmul.mubr.bf16.gmra.mrb[0].mxu0 %v117
  %v264 = vpop.f32.mrb[0].mxu0
  %v265 = vadd.f32 0.0, %v264
  %v266 = vpop.f32.mrb[0].mxu0
  %v267 = vpop.f32.mrb[0].mxu0
  %v268 = vadd.f32 0.0, %v267
  %v269 = vpop.f32.mrb[0].mxu0
  %270 = vdwg.mxu0
  %v271 = vpack.c.bf16 %v212, %v209
  %v272 = vpack.c.bf16 %v220, %v217
  %v273 = vpack.c.bf16 %v228, %v225
  %v274 = vpack.c.bf16 %v236, %v233
  %v275 = vpack.c.bf16 %v244, %v241
  %v276 = vpack.c.bf16 %v252, %v249
  %v277 = vpack.c.bf16 %v260, %v257
  %v278 = vpack.c.bf16 %v268, %v265
  %v279 = vld [vmem:[%s3] sm:$0x1]
  %v281 = vlaneseq
  %v282 = vshrl.u32 %v281, 7
  %v283 = vsub.s32 0, %v282
  %v284 = vrot.slane %v279, %v283
  %v302 = vunpack.c.l.b16 %v30
  %v303 = vunpack.c.l.b16 %v31
  %v304 = vunpack.c.l.b16 %v32
  %v305 = vunpack.c.l.b16 %v33
  %v306 = vunpack.c.l.b16 %v34
  %v307 = vunpack.c.l.b16 %v35
  %v308 = vunpack.c.l.b16 %v36
  %v309 = vunpack.c.l.b16 %v37
  %v310 = vunpack.c.l.b16 %v38
  %v311 = vunpack.c.l.b16 %v39
  %v312 = vunpack.c.l.b16 %v40
  %v313 = vunpack.c.l.b16 %v41
  %v314 = vunpack.c.l.b16 %v42
  %v315 = vunpack.c.l.b16 %v43
  %v316 = vunpack.c.l.b16 %v44
  %v317 = vunpack.c.l.b16 %v45
  %v318 = vpack.c.b16 %v303, %v302
  %v319 = vpack.c.b16 %v305, %v304
  %v320 = vpack.c.b16 %v307, %v306
  %v321 = vpack.c.b16 %v309, %v308
  %v322 = vpack.c.b16 %v311, %v310
  %v323 = vpack.c.b16 %v313, %v312
  %v324 = vpack.c.b16 %v315, %v314
  %v325 = vpack.c.b16 %v317, %v316
  %334 = vmatprep.subr.bf16.mxu0 0
  %335 = vmatpush1.bf16.msra.mxu0 %v271
  %336 = vmatprep.subr.bf16.mxu0 0
  %337 = vmatpush1.bf16.msra.mxu0 %v272
  %338 = vmatprep.subr.bf16.mxu0 0
  %339 = vmatpush1.bf16.msra.mxu0 %v273
  %340 = vmatprep.subr.bf16.mxu0 0
  %341 = vmatpush1.bf16.msra.mxu0 %v274
  %342 = vmatprep.subr.bf16.mxu0 0
  %343 = vmatpush1.bf16.msra.mxu0 %v275
  %344 = vmatprep.subr.bf16.mxu0 0
  %345 = vmatpush1.bf16.msra.mxu0 %v276
  %346 = vmatprep.subr.bf16.mxu0 0
  %347 = vmatpush1.bf16.msra.mxu0 %v277
  %348 = vmatprep.subr.bf16.mxu0 0
  %349 = vmatpush1.bf16.msra.mxu0 %v278
  %350 = vmatprep.subr.bf16.mxu0 0
  %351 = vmatpush1.bf16.msra.mxu0 0
  %352 = vmatprep.subr.bf16.mxu0 0
  %353 = vmatpush1.bf16.msra.mxu0 0
  %354 = vmatprep.subr.bf16.mxu0 0
  %355 = vmatpush1.bf16.msra.mxu0 0
  %356 = vmatprep.subr.bf16.mxu0 0
  %357 = vmatpush1.bf16.msra.mxu0 0
  %358 = vmatprep.subr.bf16.mxu0 0
  %359 = vmatpush1.bf16.msra.mxu0 0
  %360 = vmatprep.subr.bf16.mxu0 0
  %361 = vmatpush1.bf16.msra.mxu0 0
  %362 = vmatprep.subr.bf16.mxu0 0
  %363 = vmatpush1.bf16.msra.mxu0 0
  %364 = vmatprep.subr.bf16.mxu0 0
  %365 = vmatpush1.bf16.msra.mxu0 0
  %366 = vmatprep.mubr.bf16.mxu0 0
  %367 = vmatmul.mubr.bf16.gmra.mrb[0].mxu0 %v318
  %v368 = vpop.f32.mrb[0].mxu0
  %v369 = vadd.f32 %v284, %v368
  %v370 = vpop.f32.mrb[0].mxu0
  %v371 = vpop.f32.mrb[0].mxu0
  %v372 = vadd.f32 %v284, %v371
  %v373 = vpop.f32.mrb[0].mxu0
  %374 = vmatprep.mubr.bf16.mxu0 0
  %375 = vmatmul.mubr.bf16.gmra.mrb[0].mxu0 %v319
  %v376 = vpop.f32.mrb[0].mxu0
  %v377 = vadd.f32 %v284, %v376
  %v378 = vpop.f32.mrb[0].mxu0
  %v379 = vpop.f32.mrb[0].mxu0
  %v380 = vadd.f32 %v284, %v379
  %v381 = vpop.f32.mrb[0].mxu0
  %382 = vmatprep.mubr.bf16.mxu0 0
  %383 = vmatmul.mubr.bf16.gmra.mrb[0].mxu0 %v320
  %v384 = vpop.f32.mrb[0].mxu0
  %v385 = vadd.f32 %v284, %v384
  %v386 = vpop.f32.mrb[0].mxu0
  %v387 = vpop.f32.mrb[0].mxu0
  %v388 = vadd.f32 %v284, %v387
  %v389 = vpop.f32.mrb[0].mxu0
  %390 = vmatprep.mubr.bf16.mxu0 0
  %391 = vmatmul.mubr.bf16.gmra.mrb[0].mxu0 %v321
  %v392 = vpop.f32.mrb[0].mxu0
  %v393 = vadd.f32 %v284, %v392
  %v394 = vpop.f32.mrb[0].mxu0
  %v395 = vpop.f32.mrb[0].mxu0
  %v396 = vadd.f32 %v284, %v395
  %v397 = vpop.f32.mrb[0].mxu0
  %398 = vmatprep.mubr.bf16.mxu0 0
  %399 = vmatmul.mubr.bf16.gmra.mrb[0].mxu0 %v322
  %v400 = vpop.f32.mrb[0].mxu0
  %v401 = vadd.f32 %v284, %v400
  %v402 = vpop.f32.mrb[0].mxu0
  %v403 = vpop.f32.mrb[0].mxu0
  %v404 = vadd.f32 %v284, %v403
  %v405 = vpop.f32.mrb[0].mxu0
  %406 = vmatprep.mubr.bf16.mxu0 0
  %407 = vmatmul.mubr.bf16.gmra.mrb[0].mxu0 %v323
  %v408 = vpop.f32.mrb[0].mxu0
  %v409 = vadd.f32 %v284, %v408
  %v410 = vpop.f32.mrb[0].mxu0
  %v411 = vpop.f32.mrb[0].mxu0
  %v412 = vadd.f32 %v284, %v411
  %v413 = vpop.f32.mrb[0].mxu0
  %414 = vmatprep.mubr.bf16.mxu0 0
  %415 = vmatmul.mubr.bf16.gmra.mrb[0].mxu0 %v324
  %v416 = vpop.f32.mrb[0].mxu0
  %v417 = vadd.f32 %v284, %v416
  %v418 = vpop.f32.mrb[0].mxu0
  %v419 = vpop.f32.mrb[0].mxu0
  %v420 = vadd.f32 %v284, %v419
  %v421 = vpop.f32.mrb[0].mxu0
  %422 = vmatprep.mubr.bf16.mxu0 0
  %423 = vmatmul.mubr.bf16.gmra.mrb[0].mxu0 %v325
  %v424 = vpop.f32.mrb[0].mxu0
  %v425 = vadd.f32 %v284, %v424
  %v426 = vpop.f32.mrb[0].mxu0
  %v427 = vpop.f32.mrb[0].mxu0
  %v428 = vadd.f32 %v284, %v427
  %v429 = vpop.f32.mrb[0].mxu0
  %430 = vdwg.mxu0
  %v431 = vmax.f32 %v369, 0.0
  %v432 = vmax.f32 %v372, 0.0
  %v433 = vmax.f32 %v377, 0.0
  %v434 = vmax.f32 %v380, 0.0
  %v435 = vmax.f32 %v385, 0.0
  %v436 = vmax.f32 %v388, 0.0
  %v437 = vmax.f32 %v393, 0.0
  %v438 = vmax.f32 %v396, 0.0
  %v439 = vmax.f32 %v401, 0.0
  %v440 = vmax.f32 %v404, 0.0
  %v441 = vmax.f32 %v409, 0.0
  %v442 = vmax.f32 %v412, 0.0
  %v443 = vmax.f32 %v417, 0.0
  %v444 = vmax.f32 %v420, 0.0
  %v445 = vmax.f32 %v425, 0.0
  %v446 = vmax.f32 %v428, 0.0
  %v447 = vpack.c.bf16 %v432, %v431
  %v448 = vpack.c.bf16 %v434, %v433
  %v449 = vpack.c.bf16 %v436, %v435
  %v450 = vpack.c.bf16 %v438, %v437
  %v451 = vpack.c.bf16 %v440, %v439
  %v452 = vpack.c.bf16 %v442, %v441
  %v453 = vpack.c.bf16 %v444, %v443
  %v454 = vpack.c.bf16 %v446, %v445
  %v455 = vld [vmem:[%s4] sm:$0xf]
  %v456 = vld [vmem:[%s4 + $0x4] sm:$0xf]
  %v457 = vld [vmem:[%s4 + $0x8] sm:$0xf]
  %v458 = vld [vmem:[%s4 + $0xc] sm:$0xf]
  %v459 = vld [vmem:[%s4 + $0x10] sm:$0xf]
  %v460 = vld [vmem:[%s4 + $0x14] sm:$0xf]
  %v461 = vld [vmem:[%s4 + $0x18] sm:$0xf]
  %v462 = vld [vmem:[%s4 + $0x1c] sm:$0xf]
  %v463 = vld [vmem:[%s4 + $0x20] sm:$0xf]
  %v464 = vld [vmem:[%s4 + $0x24] sm:$0xf]
  %v465 = vld [vmem:[%s4 + $0x28] sm:$0xf]
  %v466 = vld [vmem:[%s4 + $0x2c] sm:$0xf]
  %v467 = vld [vmem:[%s4 + $0x30] sm:$0xf]
  %v468 = vld [vmem:[%s4 + $0x34] sm:$0xf]
  %v469 = vld [vmem:[%s4 + $0x38] sm:$0xf]
  %v470 = vld [vmem:[%s4 + $0x3c] sm:$0xf]
  %v487 = vunpack.c.l.b16 %v455
  %v488 = vunpack.c.l.b16 %v456
  %v489 = vunpack.c.l.b16 %v457
  %v490 = vunpack.c.l.b16 %v458
  %v491 = vunpack.c.l.b16 %v459
  %v492 = vunpack.c.l.b16 %v460
  %v493 = vunpack.c.l.b16 %v461
  %v494 = vunpack.c.l.b16 %v462
  %v495 = vunpack.c.l.b16 %v463
  %v496 = vunpack.c.l.b16 %v464
  %v497 = vunpack.c.l.b16 %v465
  %v498 = vunpack.c.l.b16 %v466
  %v499 = vunpack.c.l.b16 %v467
  %v500 = vunpack.c.l.b16 %v468
  %v501 = vunpack.c.l.b16 %v469
  %v502 = vunpack.c.l.b16 %v470
  %v503 = vpack.c.b16 %v488, %v487
  %v504 = vpack.c.b16 %v490, %v489
  %v505 = vpack.c.b16 %v492, %v491
  %v506 = vpack.c.b16 %v494, %v493
  %v507 = vpack.c.b16 %v496, %v495
  %v508 = vpack.c.b16 %v498, %v497
  %v509 = vpack.c.b16 %v500, %v499
  %v510 = vpack.c.b16 %v502, %v501
  %519 = vmatprep.subr.bf16.mxu0 0
  %520 = vmatpush1.bf16.msra.mxu0 %v503
  %521 = vmatprep.subr.bf16.mxu0 0
  %522 = vmatpush1.bf16.msra.mxu0 %v504
  %523 = vmatprep.subr.bf16.mxu0 0
  %524 = vmatpush1.bf16.msra.mxu0 %v505
  %525 = vmatprep.subr.bf16.mxu0 0
  %526 = vmatpush1.bf16.msra.mxu0 %v506
  %527 = vmatprep.subr.bf16.mxu0 0
  %528 = vmatpush1.bf16.msra.mxu0 %v507
  %529 = vmatprep.subr.bf16.mxu0 0
  %530 = vmatpush1.bf16.msra.mxu0 %v508
  %531 = vmatprep.subr.bf16.mxu0 0
  %532 = vmatpush1.bf16.msra.mxu0 %v509
  %533 = vmatprep.subr.bf16.mxu0 0
  %534 = vmatpush1.bf16.msra.mxu0 %v510
  %535 = vmatprep.subr.bf16.mxu0 0
  %536 = vmatpush1.bf16.msra.mxu0 0
  %537 = vmatprep.subr.bf16.mxu0 0
  %538 = vmatpush1.bf16.msra.mxu0 0
  %539 = vmatprep.subr.bf16.mxu0 0
  %540 = vmatpush1.bf16.msra.mxu0 0
  %541 = vmatprep.subr.bf16.mxu0 0
  %542 = vmatpush1.bf16.msra.mxu0 0
  %543 = vmatprep.subr.bf16.mxu0 0
  %544 = vmatpush1.bf16.msra.mxu0 0
  %545 = vmatprep.subr.bf16.mxu0 0
  %546 = vmatpush1.bf16.msra.mxu0 0
  %547 = vmatprep.subr.bf16.mxu0 0
  %548 = vmatpush1.bf16.msra.mxu0 0
  %549 = vmatprep.subr.bf16.mxu0 0
  %550 = vmatpush1.bf16.msra.mxu0 0
  %551 = vmatprep.mubr.bf16.mxu0 0
  %552 = vmatmul.mubr.bf16.gmra.mrb[0].mxu0 %v447
  %v553 = vpop.f32.mrb[0].mxu0
  %v554 = vadd.f32 0.0, %v553
  %v555 = vpop.f32.mrb[0].mxu0
  %v556 = vpop.f32.mrb[0].mxu0
  %v557 = vadd.f32 0.0, %v556
  %v558 = vpop.f32.mrb[0].mxu0
  %559 = vmatprep.mubr.bf16.mxu0 0
  %560 = vmatmul.mubr.bf16.gmra.mrb[0].mxu0 %v448
  %v561 = vpop.f32.mrb[0].mxu0
  %v562 = vadd.f32 0.0, %v561
  %v563 = vpop.f32.mrb[0].mxu0
  %v564 = vpop.f32.mrb[0].mxu0
  %v565 = vadd.f32 0.0, %v564
  %v566 = vpop.f32.mrb[0].mxu0
  %567 = vmatprep.mubr.bf16.mxu0 0
  %568 = vmatmul.mubr.bf16.gmra.mrb[0].mxu0 %v449
  %v569 = vpop.f32.mrb[0].mxu0
  %v570 = vadd.f32 0.0, %v569
  %v571 = vpop.f32.mrb[0].mxu0
  %v572 = vpop.f32.mrb[0].mxu0
  %v573 = vadd.f32 0.0, %v572
  %v574 = vpop.f32.mrb[0].mxu0
  %575 = vmatprep.mubr.bf16.mxu0 0
  %576 = vmatmul.mubr.bf16.gmra.mrb[0].mxu0 %v450
  %v577 = vpop.f32.mrb[0].mxu0
  %v578 = vadd.f32 0.0, %v577
  %v579 = vpop.f32.mrb[0].mxu0
  %v580 = vpop.f32.mrb[0].mxu0
  %v581 = vadd.f32 0.0, %v580
  %v582 = vpop.f32.mrb[0].mxu0
  %583 = vmatprep.mubr.bf16.mxu0 0
  %584 = vmatmul.mubr.bf16.gmra.mrb[0].mxu0 %v451
  %v585 = vpop.f32.mrb[0].mxu0
  %v586 = vadd.f32 0.0, %v585
  %v587 = vpop.f32.mrb[0].mxu0
  %v588 = vpop.f32.mrb[0].mxu0
  %v589 = vadd.f32 0.0, %v588
  %v590 = vpop.f32.mrb[0].mxu0
  %591 = vmatprep.mubr.bf16.mxu0 0
  %592 = vmatmul.mubr.bf16.gmra.mrb[0].mxu0 %v452
  %v593 = vpop.f32.mrb[0].mxu0
  %v594 = vadd.f32 0.0, %v593
  %v595 = vpop.f32.mrb[0].mxu0
  %v596 = vpop.f32.mrb[0].mxu0
  %v597 = vadd.f32 0.0, %v596
  %v598 = vpop.f32.mrb[0].mxu0
  %599 = vmatprep.mubr.bf16.mxu0 0
  %600 = vmatmul.mubr.bf16.gmra.mrb[0].mxu0 %v453
  %v601 = vpop.f32.mrb[0].mxu0
  %v602 = vadd.f32 0.0, %v601
  %v603 = vpop.f32.mrb[0].mxu0
  %v604 = vpop.f32.mrb[0].mxu0
  %v605 = vadd.f32 0.0, %v604
  %v606 = vpop.f32.mrb[0].mxu0
  %607 = vmatprep.mubr.bf16.mxu0 0
  %608 = vmatmul.mubr.bf16.gmra.mrb[0].mxu0 %v454
  %v609 = vpop.f32.mrb[0].mxu0
  %v610 = vadd.f32 0.0, %v609
  %v611 = vpop.f32.mrb[0].mxu0
  %v612 = vpop.f32.mrb[0].mxu0
  %v613 = vadd.f32 0.0, %v612
  %v614 = vpop.f32.mrb[0].mxu0
  %615 = vdwg.mxu0
  %v616 = vpack.c.bf16 %v557, %v554
  %v617 = vpack.c.bf16 %v565, %v562
  %v618 = vpack.c.bf16 %v573, %v570
  %v619 = vpack.c.bf16 %v581, %v578
  %v620 = vpack.c.bf16 %v589, %v586
  %v621 = vpack.c.bf16 %v597, %v594
  %v622 = vpack.c.bf16 %v605, %v602
  %v623 = vpack.c.bf16 %v613, %v610
  %v624 = vld [vmem:[%s5] sm:$0x1]
  %v626 = vlaneseq
  %v627 = vshrl.u32 %v626, 7
  %v628 = vsub.s32 0, %v627
  %v629 = vrot.slane %v624, %v628
  %631 = vmatprep.subr.bf16.mxu0 0
  %632 = vmatpush1.bf16.msra.mxu0 %v616
  %633 = vmatprep.subr.bf16.mxu0 0
  %634 = vmatpush1.bf16.msra.mxu0 %v617
  %635 = vmatprep.subr.bf16.mxu0 0
  %636 = vmatpush1.bf16.msra.mxu0 %v618
  %637 = vmatprep.subr.bf16.mxu0 0
  %638 = vmatpush1.bf16.msra.mxu0 %v619
  %639 = vmatprep.subr.bf16.mxu0 0
  %640 = vmatpush1.bf16.msra.mxu0 %v620
  %641 = vmatprep.subr.bf16.mxu0 0
  %642 = vmatpush1.bf16.msra.mxu0 %v621
  %643 = vmatprep.subr.bf16.mxu0 0
  %644 = vmatpush1.bf16.msra.mxu0 %v622
  %645 = vmatprep.subr.bf16.mxu0 0
  %646 = vmatpush1.bf16.msra.mxu0 %v623
  %647 = vmatprep.subr.bf16.mxu0 0
  %648 = vmatpush1.bf16.msra.mxu0 0
  %649 = vmatprep.subr.bf16.mxu0 0
  %650 = vmatpush1.bf16.msra.mxu0 0
  %651 = vmatprep.subr.bf16.mxu0 0
  %652 = vmatpush1.bf16.msra.mxu0 0
  %653 = vmatprep.subr.bf16.mxu0 0
  %654 = vmatpush1.bf16.msra.mxu0 0
  %655 = vmatprep.subr.bf16.mxu0 0
  %656 = vmatpush1.bf16.msra.mxu0 0
  %657 = vmatprep.subr.bf16.mxu0 0
  %658 = vmatpush1.bf16.msra.mxu0 0
  %659 = vmatprep.subr.bf16.mxu0 0
  %660 = vmatpush1.bf16.msra.mxu0 0
  %661 = vmatprep.subr.bf16.mxu0 0
  %662 = vmatpush1.bf16.msra.mxu0 0
  %663 = vmatprep.mubr.bf16.mxu0 0
  %664 = vmatmul.mubr.bf16.gmra.mrb[0].mxu0 %v318
  %v665 = vpop.f32.mrb[0].mxu0
  %v666 = vadd.f32 %v629, %v665
  %v667 = vpop.f32.mrb[0].mxu0
  %v668 = vpop.f32.mrb[0].mxu0
  %v669 = vadd.f32 %v629, %v668
  %v670 = vpop.f32.mrb[0].mxu0
  %671 = vmatprep.mubr.bf16.mxu0 0
  %672 = vmatmul.mubr.bf16.gmra.mrb[0].mxu0 %v319
  %v673 = vpop.f32.mrb[0].mxu0
  %v674 = vadd.f32 %v629, %v673
  %v675 = vpop.f32.mrb[0].mxu0
  %v676 = vpop.f32.mrb[0].mxu0
  %v677 = vadd.f32 %v629, %v676
  %v678 = vpop.f32.mrb[0].mxu0
  %679 = vmatprep.mubr.bf16.mxu0 0
  %680 = vmatmul.mubr.bf16.gmra.mrb[0].mxu0 %v320
  %v681 = vpop.f32.mrb[0].mxu0
  %v682 = vadd.f32 %v629, %v681
  %v683 = vpop.f32.mrb[0].mxu0
  %v684 = vpop.f32.mrb[0].mxu0
  %v685 = vadd.f32 %v629, %v684
  %v686 = vpop.f32.mrb[0].mxu0
  %687 = vmatprep.mubr.bf16.mxu0 0
  %688 = vmatmul.mubr.bf16.gmra.mrb[0].mxu0 %v321
  %v689 = vpop.f32.mrb[0].mxu0
  %v690 = vadd.f32 %v629, %v689
  %v691 = vpop.f32.mrb[0].mxu0
  %v692 = vpop.f32.mrb[0].mxu0
  %v693 = vadd.f32 %v629, %v692
  %v694 = vpop.f32.mrb[0].mxu0
  %695 = vmatprep.mubr.bf16.mxu0 0
  %696 = vmatmul.mubr.bf16.gmra.mrb[0].mxu0 %v322
  %v697 = vpop.f32.mrb[0].mxu0
  %v698 = vadd.f32 %v629, %v697
  %v699 = vpop.f32.mrb[0].mxu0
  %v700 = vpop.f32.mrb[0].mxu0
  %v701 = vadd.f32 %v629, %v700
  %v702 = vpop.f32.mrb[0].mxu0
  %703 = vmatprep.mubr.bf16.mxu0 0
  %704 = vmatmul.mubr.bf16.gmra.mrb[0].mxu0 %v323
  %v705 = vpop.f32.mrb[0].mxu0
  %v706 = vadd.f32 %v629, %v705
  %v707 = vpop.f32.mrb[0].mxu0
  %v708 = vpop.f32.mrb[0].mxu0
  %v709 = vadd.f32 %v629, %v708
  %v710 = vpop.f32.mrb[0].mxu0
  %711 = vmatprep.mubr.bf16.mxu0 0
  %712 = vmatmul.mubr.bf16.gmra.mrb[0].mxu0 %v324
  %v713 = vpop.f32.mrb[0].mxu0
  %v714 = vadd.f32 %v629, %v713
  %v715 = vpop.f32.mrb[0].mxu0
  %v716 = vpop.f32.mrb[0].mxu0
  %v717 = vadd.f32 %v629, %v716
  %v718 = vpop.f32.mrb[0].mxu0
  %719 = vmatprep.mubr.bf16.mxu0 0
  %720 = vmatmul.mubr.bf16.gmra.mrb[0].mxu0 %v325
  %v721 = vpop.f32.mrb[0].mxu0
  %v722 = vadd.f32 %v629, %v721
  %v723 = vpop.f32.mrb[0].mxu0
  %v724 = vpop.f32.mrb[0].mxu0
  %v725 = vadd.f32 %v629, %v724
  %v726 = vpop.f32.mrb[0].mxu0
  %727 = vdwg.mxu0
  %v728 = vmax.f32 %v666, 0.0
  %v729 = vmax.f32 %v669, 0.0
  %v730 = vmax.f32 %v674, 0.0
  %v731 = vmax.f32 %v677, 0.0
  %v732 = vmax.f32 %v682, 0.0
  %v733 = vmax.f32 %v685, 0.0
  %v734 = vmax.f32 %v690, 0.0
  %v735 = vmax.f32 %v693, 0.0
  %v736 = vmax.f32 %v698, 0.0
  %v737 = vmax.f32 %v701, 0.0
  %v738 = vmax.f32 %v706, 0.0
  %v739 = vmax.f32 %v709, 0.0
  %v740 = vmax.f32 %v714, 0.0
  %v741 = vmax.f32 %v717, 0.0
  %v742 = vmax.f32 %v722, 0.0
  %v743 = vmax.f32 %v725, 0.0
  %v744 = vpack.c.bf16 %v729, %v728
  %v745 = vpack.c.bf16 %v731, %v730
  %v746 = vpack.c.bf16 %v733, %v732
  %v747 = vpack.c.bf16 %v735, %v734
  %v748 = vpack.c.bf16 %v737, %v736
  %v749 = vpack.c.bf16 %v739, %v738
  %v750 = vpack.c.bf16 %v741, %v740
  %v751 = vpack.c.bf16 %v743, %v742
  %v752 = vld [vmem:[%s6] sm:$0xf]
  %v753 = vld [vmem:[%s6 + $0x4] sm:$0xf]
  %v754 = vld [vmem:[%s6 + $0x8] sm:$0xf]
  %v755 = vld [vmem:[%s6 + $0xc] sm:$0xf]
  %v756 = vld [vmem:[%s6 + $0x10] sm:$0xf]
  %v757 = vld [vmem:[%s6 + $0x14] sm:$0xf]
  %v758 = vld [vmem:[%s6 + $0x18] sm:$0xf]
  %v759 = vld [vmem:[%s6 + $0x1c] sm:$0xf]
  %v760 = vld [vmem:[%s6 + $0x20] sm:$0xf]
  %v761 = vld [vmem:[%s6 + $0x24] sm:$0xf]
  %v762 = vld [vmem:[%s6 + $0x28] sm:$0xf]
  %v763 = vld [vmem:[%s6 + $0x2c] sm:$0xf]
  %v764 = vld [vmem:[%s6 + $0x30] sm:$0xf]
  %v765 = vld [vmem:[%s6 + $0x34] sm:$0xf]
  %v766 = vld [vmem:[%s6 + $0x38] sm:$0xf]
  %v767 = vld [vmem:[%s6 + $0x3c] sm:$0xf]
  %v768 = vld [vmem:[%s7] sm:$0x1]
  %v770 = vlaneseq
  %v771 = vshrl.u32 %v770, 7
  %v772 = vsub.s32 0, %v771
  %v773 = vrot.slane %v768, %v772
  %v791 = vunpack.c.l.b16 %v752
  %v792 = vunpack.c.l.b16 %v753
  %v793 = vunpack.c.l.b16 %v754
  %v794 = vunpack.c.l.b16 %v755
  %v795 = vunpack.c.l.b16 %v756
  %v796 = vunpack.c.l.b16 %v757
  %v797 = vunpack.c.l.b16 %v758
  %v798 = vunpack.c.l.b16 %v759
  %v799 = vunpack.c.l.b16 %v760
  %v800 = vunpack.c.l.b16 %v761
  %v801 = vunpack.c.l.b16 %v762
  %v802 = vunpack.c.l.b16 %v763
  %v803 = vunpack.c.l.b16 %v764
  %v804 = vunpack.c.l.b16 %v765
  %v805 = vunpack.c.l.b16 %v766
  %v806 = vunpack.c.l.b16 %v767
  %v807 = vpack.c.b16 %v792, %v791
  %v808 = vpack.c.b16 %v794, %v793
  %v809 = vpack.c.b16 %v796, %v795
  %v810 = vpack.c.b16 %v798, %v797
  %v811 = vpack.c.b16 %v800, %v799
  %v812 = vpack.c.b16 %v802, %v801
  %v813 = vpack.c.b16 %v804, %v803
  %v814 = vpack.c.b16 %v806, %v805
  %823 = vmatprep.subr.bf16.mxu0 0
  %824 = vmatpush1.bf16.msra.mxu0 %v807
  %825 = vmatprep.subr.bf16.mxu0 0
  %826 = vmatpush1.bf16.msra.mxu0 %v808
  %827 = vmatprep.subr.bf16.mxu0 0
  %828 = vmatpush1.bf16.msra.mxu0 %v809
  %829 = vmatprep.subr.bf16.mxu0 0
  %830 = vmatpush1.bf16.msra.mxu0 %v810
  %831 = vmatprep.subr.bf16.mxu0 0
  %832 = vmatpush1.bf16.msra.mxu0 %v811
  %833 = vmatprep.subr.bf16.mxu0 0
  %834 = vmatpush1.bf16.msra.mxu0 %v812
  %835 = vmatprep.subr.bf16.mxu0 0
  %836 = vmatpush1.bf16.msra.mxu0 %v813
  %837 = vmatprep.subr.bf16.mxu0 0
  %838 = vmatpush1.bf16.msra.mxu0 %v814
  %839 = vmatprep.subr.bf16.mxu0 0
  %840 = vmatpush1.bf16.msra.mxu0 0
  %841 = vmatprep.subr.bf16.mxu0 0
  %842 = vmatpush1.bf16.msra.mxu0 0
  %843 = vmatprep.subr.bf16.mxu0 0
  %844 = vmatpush1.bf16.msra.mxu0 0
  %845 = vmatprep.subr.bf16.mxu0 0
  %846 = vmatpush1.bf16.msra.mxu0 0
  %847 = vmatprep.subr.bf16.mxu0 0
  %848 = vmatpush1.bf16.msra.mxu0 0
  %849 = vmatprep.subr.bf16.mxu0 0
  %850 = vmatpush1.bf16.msra.mxu0 0
  %851 = vmatprep.subr.bf16.mxu0 0
  %852 = vmatpush1.bf16.msra.mxu0 0
  %853 = vmatprep.subr.bf16.mxu0 0
  %854 = vmatpush1.bf16.msra.mxu0 0
  %855 = vmatprep.mubr.bf16.mxu0 0
  %856 = vmatmul.mubr.bf16.gmra.mrb[0].mxu0 %v744
  %v857 = vpop.f32.mrb[0].mxu0
  %v858 = vadd.f32 %v773, %v857
  %v859 = vpop.f32.mrb[0].mxu0
  %v860 = vpop.f32.mrb[0].mxu0
  %v861 = vadd.f32 %v773, %v860
  %v862 = vpop.f32.mrb[0].mxu0
  %863 = vmatprep.mubr.bf16.mxu0 0
  %864 = vmatmul.mubr.bf16.gmra.mrb[0].mxu0 %v745
  %v865 = vpop.f32.mrb[0].mxu0
  %v866 = vadd.f32 %v773, %v865
  %v867 = vpop.f32.mrb[0].mxu0
  %v868 = vpop.f32.mrb[0].mxu0
  %v869 = vadd.f32 %v773, %v868
  %v870 = vpop.f32.mrb[0].mxu0
  %871 = vmatprep.mubr.bf16.mxu0 0
  %872 = vmatmul.mubr.bf16.gmra.mrb[0].mxu0 %v746
  %v873 = vpop.f32.mrb[0].mxu0
  %v874 = vadd.f32 %v773, %v873
  %v875 = vpop.f32.mrb[0].mxu0
  %v876 = vpop.f32.mrb[0].mxu0
  %v877 = vadd.f32 %v773, %v876
  %v878 = vpop.f32.mrb[0].mxu0
  %879 = vmatprep.mubr.bf16.mxu0 0
  %880 = vmatmul.mubr.bf16.gmra.mrb[0].mxu0 %v747
  %v881 = vpop.f32.mrb[0].mxu0
  %v882 = vadd.f32 %v773, %v881
  %v883 = vpop.f32.mrb[0].mxu0
  %v884 = vpop.f32.mrb[0].mxu0
  %v885 = vadd.f32 %v773, %v884
  %v886 = vpop.f32.mrb[0].mxu0
  %887 = vmatprep.mubr.bf16.mxu0 0
  %888 = vmatmul.mubr.bf16.gmra.mrb[0].mxu0 %v748
  %v889 = vpop.f32.mrb[0].mxu0
  %v890 = vadd.f32 %v773, %v889
  %v891 = vpop.f32.mrb[0].mxu0
  %v892 = vpop.f32.mrb[0].mxu0
  %v893 = vadd.f32 %v773, %v892
  %v894 = vpop.f32.mrb[0].mxu0
  %895 = vmatprep.mubr.bf16.mxu0 0
  %896 = vmatmul.mubr.bf16.gmra.mrb[0].mxu0 %v749
  %v897 = vpop.f32.mrb[0].mxu0
  %v898 = vadd.f32 %v773, %v897
  %v899 = vpop.f32.mrb[0].mxu0
  %v900 = vpop.f32.mrb[0].mxu0
  %v901 = vadd.f32 %v773, %v900
  %v902 = vpop.f32.mrb[0].mxu0
  %903 = vmatprep.mubr.bf16.mxu0 0
  %904 = vmatmul.mubr.bf16.gmra.mrb[0].mxu0 %v750
  %v905 = vpop.f32.mrb[0].mxu0
  %v906 = vadd.f32 %v773, %v905
  %v907 = vpop.f32.mrb[0].mxu0
  %v908 = vpop.f32.mrb[0].mxu0
  %v909 = vadd.f32 %v773, %v908
  %v910 = vpop.f32.mrb[0].mxu0
  %911 = vmatprep.mubr.bf16.mxu0 0
  %912 = vmatmul.mubr.bf16.gmra.mrb[0].mxu0 %v751
  %v913 = vpop.f32.mrb[0].mxu0
  %v914 = vadd.f32 %v773, %v913
  %v915 = vpop.f32.mrb[0].mxu0
  %v916 = vpop.f32.mrb[0].mxu0
  %v917 = vadd.f32 %v773, %v916
  %v918 = vpop.f32.mrb[0].mxu0
  %919 = vdwg.mxu0
  %920 = vmax.xlane.f32.xlu0 %v858
  %v921 = vpop.xlane.xlu0 %920
  %922 = vmax.xlane.f32.xlu0 %v861
  %v923 = vpop.xlane.xlu0 %922
  %924 = vmax.xlane.f32.xlu0 %v866
  %v925 = vpop.xlane.xlu0 %924
  %926 = vmax.xlane.f32.xlu0 %v869
  %v927 = vpop.xlane.xlu0 %926
  %928 = vmax.xlane.f32.xlu0 %v874
  %v929 = vpop.xlane.xlu0 %928
  %930 = vmax.xlane.f32.xlu0 %v877
  %v931 = vpop.xlane.xlu0 %930
  %932 = vmax.xlane.f32.xlu0 %v882
  %v933 = vpop.xlane.xlu0 %932
  %934 = vmax.xlane.f32.xlu0 %v885
  %v935 = vpop.xlane.xlu0 %934
  %936 = vmax.xlane.f32.xlu0 %v890
  %v937 = vpop.xlane.xlu0 %936
  %938 = vmax.xlane.f32.xlu0 %v893
  %v939 = vpop.xlane.xlu0 %938
  %940 = vmax.xlane.f32.xlu0 %v898
  %v941 = vpop.xlane.xlu0 %940
  %942 = vmax.xlane.f32.xlu0 %v901
  %v943 = vpop.xlane.xlu0 %942
  %944 = vmax.xlane.f32.xlu0 %v906
  %v945 = vpop.xlane.xlu0 %944
  %946 = vmax.xlane.f32.xlu0 %v909
  %v947 = vpop.xlane.xlu0 %946
  %948 = vmax.xlane.f32.xlu0 %v914
  %v949 = vpop.xlane.xlu0 %948
  %950 = vmax.xlane.f32.xlu0 %v917
  %v951 = vpop.xlane.xlu0 %950
  %v952 = vsub.f32 %v858, %v921
  %v953 = vsub.f32 %v861, %v923
  %v954 = vsub.f32 %v866, %v925
  %v955 = vsub.f32 %v869, %v927
  %v956 = vsub.f32 %v874, %v929
  %v957 = vsub.f32 %v877, %v931
  %v958 = vsub.f32 %v882, %v933
  %v959 = vsub.f32 %v885, %v935
  %v960 = vsub.f32 %v890, %v937
  %v961 = vsub.f32 %v893, %v939
  %v962 = vsub.f32 %v898, %v941
  %v963 = vsub.f32 %v901, %v943
  %v964 = vsub.f32 %v906, %v945
  %v965 = vsub.f32 %v909, %v947
  %v966 = vsub.f32 %v914, %v949
  %v967 = vsub.f32 %v917, %v951
  %v968 = vmul.f32 %v952, 1.442695
  %v969 = vpow.pop %v968
  %v970 = vmul.f32 %v953, 1.442695
  %v971 = vpow.pop %v970
  %v972 = vmul.f32 %v954, 1.442695
  %v973 = vpow.pop %v972
  %v974 = vmul.f32 %v955, 1.442695
  %v975 = vpow.pop %v974
  %v976 = vmul.f32 %v956, 1.442695
  %v977 = vpow.pop %v976
  %v978 = vmul.f32 %v957, 1.442695
  %v979 = vpow.pop %v978
  %v980 = vmul.f32 %v958, 1.442695
  %v981 = vpow.pop %v980
  %v982 = vmul.f32 %v959, 1.442695
  %v983 = vpow.pop %v982
  %v984 = vmul.f32 %v960, 1.442695
  %v985 = vpow.pop %v984
  %v986 = vmul.f32 %v961, 1.442695
  %v987 = vpow.pop %v986
  %v988 = vmul.f32 %v962, 1.442695
  %v989 = vpow.pop %v988
  %v990 = vmul.f32 %v963, 1.442695
  %v991 = vpow.pop %v990
  %v992 = vmul.f32 %v964, 1.442695
  %v993 = vpow.pop %v992
  %v994 = vmul.f32 %v965, 1.442695
  %v995 = vpow.pop %v994
  %v996 = vmul.f32 %v966, 1.442695
  %v997 = vpow.pop %v996
  %v998 = vmul.f32 %v967, 1.442695
  %v999 = vpow.pop %v998
  %1000 = vadd.xlane.f32.xlu0 %v969
  %v1001 = vpop.xlane.xlu0 %1000
  %1002 = vadd.xlane.f32.xlu0 %v971
  %v1003 = vpop.xlane.xlu0 %1002
  %1004 = vadd.xlane.f32.xlu0 %v973
  %v1005 = vpop.xlane.xlu0 %1004
  %1006 = vadd.xlane.f32.xlu0 %v975
  %v1007 = vpop.xlane.xlu0 %1006
  %1008 = vadd.xlane.f32.xlu0 %v977
  %v1009 = vpop.xlane.xlu0 %1008
  %1010 = vadd.xlane.f32.xlu0 %v979
  %v1011 = vpop.xlane.xlu0 %1010
  %1012 = vadd.xlane.f32.xlu0 %v981
  %v1013 = vpop.xlane.xlu0 %1012
  %1014 = vadd.xlane.f32.xlu0 %v983
  %v1015 = vpop.xlane.xlu0 %1014
  %1016 = vadd.xlane.f32.xlu0 %v985
  %v1017 = vpop.xlane.xlu0 %1016
  %1018 = vadd.xlane.f32.xlu0 %v987
  %v1019 = vpop.xlane.xlu0 %1018
  %1020 = vadd.xlane.f32.xlu0 %v989
  %v1021 = vpop.xlane.xlu0 %1020
  %1022 = vadd.xlane.f32.xlu0 %v991
  %v1023 = vpop.xlane.xlu0 %1022
  %1024 = vadd.xlane.f32.xlu0 %v993
  %v1025 = vpop.xlane.xlu0 %1024
  %1026 = vadd.xlane.f32.xlu0 %v995
  %v1027 = vpop.xlane.xlu0 %1026
  %1028 = vadd.xlane.f32.xlu0 %v997
  %v1029 = vpop.xlane.xlu0 %1028
  %1030 = vadd.xlane.f32.xlu0 %v999
  %v1031 = vpop.xlane.xlu0 %1030
  %v1032 = vlog2.pop %v1001
  %v1033 = vmul.f32 %v1032, 0.6931472
  %v1034 = vlog2.pop %v1003
  %v1035 = vmul.f32 %v1034, 0.6931472
  %v1036 = vlog2.pop %v1005
  %v1037 = vmul.f32 %v1036, 0.6931472
  %v1038 = vlog2.pop %v1007
  %v1039 = vmul.f32 %v1038, 0.6931472
  %v1040 = vlog2.pop %v1009
  %v1041 = vmul.f32 %v1040, 0.6931472
  %v1042 = vlog2.pop %v1011
  %v1043 = vmul.f32 %v1042, 0.6931472
  %v1044 = vlog2.pop %v1013
  %v1045 = vmul.f32 %v1044, 0.6931472
  %v1046 = vlog2.pop %v1015
  %v1047 = vmul.f32 %v1046, 0.6931472
  %v1048 = vlog2.pop %v1017
  %v1049 = vmul.f32 %v1048, 0.6931472
  %v1050 = vlog2.pop %v1019
  %v1051 = vmul.f32 %v1050, 0.6931472
  %v1052 = vlog2.pop %v1021
  %v1053 = vmul.f32 %v1052, 0.6931472
  %v1054 = vlog2.pop %v1023
  %v1055 = vmul.f32 %v1054, 0.6931472
  %v1056 = vlog2.pop %v1025
  %v1057 = vmul.f32 %v1056, 0.6931472
  %v1058 = vlog2.pop %v1027
  %v1059 = vmul.f32 %v1058, 0.6931472
  %v1060 = vlog2.pop %v1029
  %v1061 = vmul.f32 %v1060, 0.6931472
  %v1062 = vlog2.pop %v1031
  %v1063 = vmul.f32 %v1062, 0.6931472
  %v1064 = vsub.f32 %v952, %v1033
  %v1065 = vsub.f32 %v953, %v1035
  %v1066 = vsub.f32 %v954, %v1037
  %v1067 = vsub.f32 %v955, %v1039
  %v1068 = vsub.f32 %v956, %v1041
  %v1069 = vsub.f32 %v957, %v1043
  %v1070 = vsub.f32 %v958, %v1045
  %v1071 = vsub.f32 %v959, %v1047
  %v1072 = vsub.f32 %v960, %v1049
  %v1073 = vsub.f32 %v961, %v1051
  %v1074 = vsub.f32 %v962, %v1053
  %v1075 = vsub.f32 %v963, %v1055
  %v1076 = vsub.f32 %v964, %v1057
  %v1077 = vsub.f32 %v965, %v1059
  %v1078 = vsub.f32 %v966, %v1061
  %v1079 = vsub.f32 %v967, %v1063
  %1080 = vst [vmem:[%s8] sm:$0xff] %v1064
  %1081 = vst [vmem:[%s8 + $0x8] sm:$0xff] %v1065
  %1082 = vst [vmem:[%s8 + $0x10] sm:$0xff] %v1066
  %1083 = vst [vmem:[%s8 + $0x18] sm:$0xff] %v1067
  %1084 = vst [vmem:[%s8 + $0x20] sm:$0xff] %v1068
  %1085 = vst [vmem:[%s8 + $0x28] sm:$0xff] %v1069
  %1086 = vst [vmem:[%s8 + $0x30] sm:$0xff] %v1070
  %1087 = vst [vmem:[%s8 + $0x38] sm:$0xff] %v1071
  %1088 = vst [vmem:[%s8 + $0x40] sm:$0xff] %v1072
  %1089 = vst [vmem:[%s8 + $0x48] sm:$0xff] %v1073
  %1090 = vst [vmem:[%s8 + $0x50] sm:$0xff] %v1074
  %1091 = vst [vmem:[%s8 + $0x58] sm:$0xff] %v1075
  %1092 = vst [vmem:[%s8 + $0x60] sm:$0xff] %v1076
  %1093 = vst [vmem:[%s8 + $0x68] sm:$0xff] %v1077
  %1094 = vst [vmem:[%s8 + $0x70] sm:$0xff] %v1078
  %1095 = vst [vmem:[%s8 + $0x78] sm:$0xff] %v1079
  // Predicated region
  $region34: #{gcn_model_forward.1} parent=0 // pred_check
    _
  $region35: #{gcn_model_forward.1} parent=0 // pred_check_branch
    %1097 = sbr.rel (0) target = $region37
  $region36: #{gcn_model_forward.1} parent=0 // pred_region
    _
  $region37: #{gcn_model_forward.1} parent=0 // pred_fallthru
    _
  // Predicated region
  $region38: #{gcn_model_forward.1} parent=0 // pred_check
    _
  $region39: #{gcn_model_forward.1} parent=0 // pred_check_branch
    %1099 = sbr.rel (0) target = $region41
  $region40: #{gcn_model_forward.1} parent=0 // pred_region
    _
  $region41: #{gcn_model_forward.1} parent=0 // pred_fallthru
    _

</llo_original>
